<compile_context>
chip_gen: v5e
topology: v5e:2x2
jax: 0.10.0
libtpu: 0.0.40
codegen_flags: <defaults>
</compile_context>

<pallas_src>
import inspect

import jax
import jax.numpy as jnp
from jax.experimental import pallas as pl
from jax.experimental.pallas import tpu as pltpu

_LANE = 128     # vreg lane width      -> last-dim alignment unit
_SUBLANE = 8    # vreg sublane count   -> second-to-last-dim alignment unit


def _round_up(n, m):
    return ((n + m - 1) // m) * m


def _supports_buffered():
    if not hasattr(pl, "Buffered"):
        return False
    try:
        return "pipeline_mode" in inspect.signature(pl.BlockSpec).parameters
    except (TypeError, ValueError):
        return False


def _vmem_capacity_bytes():
    try:
        return int(pltpu.get_tpu_info().vmem_capacity_bytes)
    except Exception:
        return 64 * 1024 * 1024   # conservative: v7x per-TensorCore VMEM


def dblock_kernel(x_ref, w12_ref, b12_ref, wout_ref, bout_ref, y_ref):
    """Fused DBlock forward for one batch tile.

    h = x @ [W1 | W2] + [b1 | b2]            (one MXU launch, N = 2*hid_p)
    t = tanh(h[:, :hid_p]) * sigmoid(h[:, hid_p:])   (hid_p is 128-aligned)
    y = t @ [Wmu | Wls | 0] + [bmu | bls | 0]        (one MXU launch, lane-dense N)
    """
    x = x_ref[...]
    w12 = w12_ref[...]
    if x.dtype != w12.dtype:          # safety net only; wrapper pre-casts narrow dtypes
        x = x.astype(w12.dtype)

    h = jnp.dot(x, w12, preferred_element_type=jnp.float32)
    h = h + b12_ref[...].astype(jnp.float32)

    hid_p = w12_ref.shape[1] // 2     # multiple of 128 -> aligned (free) slice
    # EUP-bound region for skinny DBlocks: tanh + sigmoid dominate, MXU is filler.
    t = jnp.tanh(h[:, :hid_p]) * jax.nn.sigmoid(h[:, hid_p:])

    wout = wout_ref[...]
    if t.dtype != wout.dtype:
        t = t.astype(wout.dtype)

    y = jnp.dot(t, wout, preferred_element_type=jnp.float32)
    y = y + bout_ref[...].astype(jnp.float32)
    y_ref[...] = y.astype(y_ref.dtype)


def dblock_forward(x, packed, *, batch_tile=512, single_buffer_weights=True,
                   out_dtype=None):
    """x: (B, input_size). packed: dict from pack_dblock_params.

    Returns (mu, logsigma), each (B, output_size).
    """
    B, in_dim = x.shape
    w12, b12 = packed["w12"], packed["b12"]
    wout, bout = packed["wout"], packed["bout"]
    out = int(packed["output_size"])
    hid2_p = w12.shape[1]          # 2 * padded hidden
    hid_p = hid2_p // 2            # 128-aligned split point
    out2_p = wout.shape[1]         # padded (lane-dense) mu||logsigma width
    assert w12.shape[0] == in_dim and wout.shape[0] == hid_p

    # Narrow (e.g. bf16) params: pre-cast x here so the per-step x DMA and its
    # double-buffered VMEM footprint are halved (in-kernel cast saves nothing).
    if jnp.dtype(w12.dtype).itemsize < jnp.dtype(x.dtype).itemsize:
        x = x.astype(w12.dtype)
    if out_dtype is None:
        out_dtype = x.dtype        # pass jnp.bfloat16 to halve output writeback

    x_item = jnp.dtype(x.dtype).itemsize
    o_item = jnp.dtype(out_dtype).itemsize
    w_bytes = sum(int(a.size) * jnp.dtype(a.dtype).itemsize
                  for a in (w12, b12, wout, bout))

    weight_mode = (pl.Buffered(1)
                   if (single_buffer_weights and _supports_buffered()) else None)
    wbuf = 1 if weight_mode is not None else 2

    vmem_cap = _vmem_capacity_bytes()

    def vmem_needed(bt_):
        # double-buffered x/out tiles + resident weights + live f32 h and t
        return (2 * bt_ * in_dim * x_item
                + 2 * bt_ * out2_p * o_item
                + wbuf * w_bytes
                + bt_ * (hid2_p + hid_p) * 4)

    # ---- batch tile --------------------------------------------------------
    bt = _round_up(max(1, min(batch_tile, B)), _SUBLANE)
    if B > _SUBLANE:
        # Prefer >=2 grid steps so the "parallel" axis shards across v7x's two
        # TensorCores (v5e/v6e have one TC: costs nothing there).
        bt = min(bt, _round_up(pl.cdiv(B, 2), _SUBLANE))
    # Shrink the tile if the VMEM budget would be blown (v7x: 64 MiB per TC).
    while bt > _SUBLANE and vmem_needed(bt) > int(0.8 * vmem_cap):
        bt = max(_SUBLANE, _round_up(bt // 2, _SUBLANE))
    # TODO(synk): if packed weights alone exceed ~1/3 of VMEM (very large DBlocks
    # on v7x), add a weight-tiled path (extra "arbitrary" grid axis over the
    # hidden/output dim with a VMEM f32 accumulator) instead of resident weights.

    Bp = _round_up(B, bt)
    xp = x if Bp == B else jnp.pad(x, ((0, Bp - B), (0, 0)))
    grid = (Bp // bt,)

    # ---- advisory cost / VMEM hints ---------------------------------------
    flops = 2 * Bp * (in_dim * hid2_p + hid_p * out2_p)
    bytes_accessed = Bp * in_dim * x_item + w_bytes + Bp * out2_p * o_item
    cost = pl.CostEstimate(flops=flops, transcendentals=Bp * hid2_p,
                           bytes_accessed=bytes_accessed)

    # Always pass an explicit scoped-VMEM limit (v5e default is only 16 MiB):
    # floored at 32 MiB, capped below physical capacity (64 MiB/TC on v7x).
    vmem_limit = min(max(int(vmem_needed(bt) * 1.25) + (1 << 20), 32 * 1024 * 1024),
                     int(0.85 * vmem_cap))

    def build(wmode):
        def wspec(shape):
            # Constant index_map: weights/biases stay resident across the grid.
            if wmode is None:
                return pl.BlockSpec(shape, lambda i: (0, 0))
            return pl.BlockSpec(shape, lambda i: (0, 0), pipeline_mode=wmode)

        return pl.pallas_call(
            dblock_kernel,
            out_shape=jax.ShapeDtypeStruct((Bp, out2_p), out_dtype),
            grid_spec=pltpu.PrefetchScalarGridSpec(
                num_scalar_prefetch=0,
                grid=grid,
                in_specs=[
                    pl.BlockSpec((bt, in_dim), lambda i: (i, 0)),  # x tile
                    wspec((in_dim, hid2_p)),                       # [W1 | W2]   (col-padded)
                    wspec((1, hid2_p)),                            # [b1 | b2]
                    wspec((hid_p, out2_p)),                        # [Wmu | Wls] (row+col padded)
                    wspec((1, out2_p)),                            # [bmu | bls]
                ],
                out_specs=pl.BlockSpec((bt, out2_p), lambda i: (i, 0)),  # [mu | ls | pad]
            ),
            compiler_params=pltpu.CompilerParams(
                dimension_semantics=("parallel",),
                vmem_limit_bytes=vmem_limit),
            cost_estimate=cost,
        )

    args = (xp, w12, b12, wout, bout)
    if weight_mode is None:
        y = build(None)(*args)
    else:
        try:
            y = build(weight_mode)(*args)
        except Exception:
            # Only Buffered(1) rejection is really "handled": any genuine error
            # unrelated to pipeline_mode reproduces in the default-buffered
            # rebuild below and propagates, so nothing is silently swallowed.
            y = build(None)(*args)

    return y[:B, :out], y[:B, out:2 * out]


def init_dblock_params(key, input_size, hidden_size, output_size, dtype=jnp.float32):
    """Deterministic init (uniform, PyTorch-Linear-like bounds).
    Weights stored as (in_features, out_features). Pass dtype=jnp.bfloat16 for
    MXU-native operands / halved DMA traffic (accumulation stays f32 in-kernel)."""
    ks = jax.random.split(key, 8)

    def lin(kw, kb, fan_in, fan_out):
        bound = 1.0 / (fan_in ** 0.5)
        w = jax.random.uniform(kw, (fan_in, fan_out), jnp.float32, -bound, bound)
        b = jax.random.uniform(kb, (1, fan_out), jnp.float32, -bound, bound)
        return w.astype(dtype), b.astype(dtype)

    w1, b1 = lin(ks[0], ks[1], input_size, hidden_size)
    w2, b2 = lin(ks[2], ks[3], input_size, hidden_size)
    wmu, bmu = lin(ks[4], ks[5], hidden_size, output_size)
    wls, bls = lin(ks[6], ks[7], hidden_size, output_size)
    return {"w1": w1, "b1": b1, "w2": w2, "b2": b2,
            "wmu": wmu, "bmu": bmu, "wls": wls, "bls": bls}


def pack_dblock_params(p):
    """Concatenate + zero-pad the DBlock Linears for the fused kernel:
      * each hidden head padded to a multiple of 128 cols -> 128-aligned split,
      * mu||logsigma head padded to a multiple of 128 cols -> lane-dense stores.
    Zero padding is exact: padded h columns give tanh(0)*sigmoid(0) = 0, and the
    corresponding Wout rows/cols are zero, so padded outputs are discarded zeros."""
    in_dim, hid = p["w1"].shape
    out = p["wmu"].shape[1]
    hid_p = _round_up(hid, _LANE)
    out2_p = _round_up(2 * out, _LANE)

    def pad_cols(a, n):
        return a if a.shape[1] == n else jnp.pad(a, ((0, 0), (0, n - a.shape[1])))

    def pad_rows(a, n):
        return a if a.shape[0] == n else jnp.pad(a, ((0, n - a.shape[0]), (0, 0)))

    w12 = jnp.concatenate([pad_cols(p["w1"], hid_p), pad_cols(p["w2"], hid_p)], axis=1)
    b12 = jnp.concatenate([pad_cols(p["b1"], hid_p), pad_cols(p["b2"], hid_p)], axis=1)
    wout = pad_cols(
        jnp.concatenate([pad_rows(p["wmu"], hid_p), pad_rows(p["wls"], hid_p)], axis=1),
        out2_p)
    bout = pad_cols(jnp.concatenate([p["bmu"], p["bls"]], axis=1), out2_p)
    return {"w12": w12, "b12": b12, "wout": wout, "bout": bout,
            "hidden_size": hid, "output_size": out}


def dblock_reference(x, p):
    t = jnp.tanh(x @ p["w1"] + p["b1"]) * jax.nn.sigmoid(x @ p["w2"] + p["b2"])
    return t @ p["wmu"] + p["bmu"], t @ p["wls"] + p["bls"]


if __name__ == "__main__":
    input_size, hidden_size, output_size = 32, 32, 16
    batch = 8

    key = jax.random.PRNGKey(0)
    kx, kp = jax.random.split(key)
    x = jax.random.normal(kx, (batch, input_size), jnp.float32)
    params = init_dblock_params(kp, input_size, hidden_size, output_size)
    packed = pack_dblock_params(params)

    mu, logsigma = dblock_forward(x, packed)
    jax.block_until_ready((mu, logsigma))

    mu_ref, ls_ref = dblock_reference(x, params)
    assert mu.shape == (batch, output_size) and logsigma.shape == (batch, output_size)
    assert jnp.allclose(mu, mu_ref, atol=1e-5, rtol=1e-5)
    assert jnp.allclose(logsigma, ls_ref, atol=1e-5, rtol=1e-5)

    # Batch not divisible by the tile -> exercises padding and a multi-step
    # (megacore-shardable) grid.
    x2 = jax.random.normal(jax.random.PRNGKey(1), (20, input_size), jnp.float32)
    mu2, ls2 = dblock_forward(x2, packed, batch_tile=8)
    jax.block_until_ready((mu2, ls2))
    mu2_ref, ls2_ref = dblock_reference(x2, params)
    assert jnp.allclose(mu2, mu2_ref, atol=1e-5, rtol=1e-5)
    assert jnp.allclose(ls2, ls2_ref, atol=1e-5, rtol=1e-5)

    # bf16 params + pre-cast bf16 x (MXU-native operands, f32 accumulation).
    # Tolerances are looser because operands are genuinely bf16.
    params_bf16 = jax.tree_util.tree_map(lambda a: a.astype(jnp.bfloat16), params)
    packed_bf16 = pack_dblock_params(params_bf16)
    mu_b, ls_b = dblock_forward(x, packed_bf16)
    jax.block_until_ready((mu_b, ls_b))
    assert jnp.allclose(mu_b.astype(jnp.float32), mu_ref, atol=1e-1, rtol=5e-2)
    assert jnp.allclose(ls_b.astype(jnp.float32), ls_ref, atol=1e-1, rtol=5e-2)

    print("KERNEL_OK")
</pallas_src>

<mosaic_0001>
module attributes {stable_mosaic.version = 11 : i64} {
  func.func @dblock_kernel(%arg0: i32, %arg1: memref<8x32xf32, #tpu.memory_space<vmem>>, %arg2: memref<32x256xf32, #tpu.memory_space<vmem>>, %arg3: memref<1x256xf32, #tpu.memory_space<vmem>>, %arg4: memref<128x128xf32, #tpu.memory_space<vmem>>, %arg5: memref<1x128xf32, #tpu.memory_space<vmem>>, %arg6: memref<8x128xf32, #tpu.memory_space<vmem>>) attributes {dimension_semantics = [#tpu.dimension_semantics<parallel>], iteration_bounds = array<i64: 1>, scalar_prefetch = 0 : i64, scratch_operands = 0 : i64, tpu.core_type = #tpu.core_type<tc>, window_params = [{transform_indices = @transform_0, window_bounds = array<i64: 8, 32>}, {pipeline_mode = #tpu.pipeline_mode<synchronous>, transform_indices = @transform_1, window_bounds = array<i64: 32, 256>}, {pipeline_mode = #tpu.pipeline_mode<synchronous>, transform_indices = @transform_2, window_bounds = array<i64: 1, 256>}, {pipeline_mode = #tpu.pipeline_mode<synchronous>, transform_indices = @transform_3, window_bounds = array<i64: 128, 128>}, {pipeline_mode = #tpu.pipeline_mode<synchronous>, transform_indices = @transform_4, window_bounds = array<i64: 1, 128>}, {transform_indices = @transform_5, window_bounds = array<i64: 8, 128>}]} {
    %c0 = arith.constant 0 : index
    %c0_0 = arith.constant 0 : index
    %0 = vector.load %arg1[%c0, %c0_0] : memref<8x32xf32, #tpu.memory_space<vmem>>, vector<8x32xf32>
    %c0_1 = arith.constant 0 : index
    %c0_2 = arith.constant 0 : index
    %1 = vector.load %arg2[%c0_1, %c0_2] : memref<32x256xf32, #tpu.memory_space<vmem>>, vector<32x256xf32>
    %cst = arith.constant dense<0.000000e+00> : vector<8x256xf32>
    %2 = tpu.matmul %0, %1, %cst {dimension_numbers = #tpu.dot_dimension_numbers<[1], [0], [0], [1], [0, 0, 1, 1], [], []>} : vector<8x32xf32>, vector<32x256xf32>, vector<8x256xf32> -> vector<8x256xf32>
    %c0_3 = arith.constant 0 : index
    %c0_4 = arith.constant 0 : index
    %3 = vector.load %arg3[%c0_3, %c0_4] : memref<1x256xf32, #tpu.memory_space<vmem>>, vector<1x256xf32>
    %4 = vector.broadcast %3 : vector<1x256xf32> to vector<8x256xf32>
    %5 = arith.addf %2, %4 : vector<8x256xf32>
    %6 = vector.extract_strided_slice %5 {offsets = [0, 0], sizes = [8, 128], strides = [1, 1]} : vector<8x256xf32> to vector<8x128xf32>
    %7 = math.tanh %6 : vector<8x128xf32>
    %8 = vector.extract_strided_slice %5 {offsets = [0, 128], sizes = [8, 128], strides = [1, 1]} : vector<8x256xf32> to vector<8x128xf32>
    %9 = arith.negf %8 : vector<8x128xf32>
    %10 = math.exp %9 : vector<8x128xf32>
    %cst_5 = arith.constant 1.000000e+00 : f32
    %11 = vector.broadcast %cst_5 : f32 to vector<8x128xf32>
    %12 = arith.addf %11, %10 : vector<8x128xf32>
    %13 = arith.divf %11, %12 : vector<8x128xf32>
    %14 = arith.mulf %7, %13 : vector<8x128xf32>
    %c0_6 = arith.constant 0 : index
    %c0_7 = arith.constant 0 : index
    %15 = vector.load %arg4[%c0_6, %c0_7] : memref<128x128xf32, #tpu.memory_space<vmem>>, vector<128x128xf32>
    %cst_8 = arith.constant dense<0.000000e+00> : vector<8x128xf32>
    %16 = tpu.matmul %14, %15, %cst_8 {dimension_numbers = #tpu.dot_dimension_numbers<[1], [0], [0], [1], [0, 0, 1, 1], [], []>} : vector<8x128xf32>, vector<128x128xf32>, vector<8x128xf32> -> vector<8x128xf32>
    %c0_9 = arith.constant 0 : index
    %c0_10 = arith.constant 0 : index
    %17 = vector.load %arg5[%c0_9, %c0_10] : memref<1x128xf32, #tpu.memory_space<vmem>>, vector<1x128xf32>
    %18 = vector.broadcast %17 : vector<1x128xf32> to vector<8x128xf32>
    %19 = arith.addf %16, %18 : vector<8x128xf32>
    %c0_11 = arith.constant 0 : index
    %c0_12 = arith.constant 0 : index
    %20 = vector.load %arg6[%c0_11, %c0_12] : memref<8x128xf32, #tpu.memory_space<vmem>>, vector<8x128xf32>
    tpu.vector_store %arg6[%c0_11, %c0_12], %19 {strides = array<i32>} : memref<8x128xf32, #tpu.memory_space<vmem>>, vector<8x128xf32>,
    return
  }
  func.func @transform_0(%arg0: i32) -> (i32, i32) {
    %c0_i32 = arith.constant 0 : i32
    %c0_i32_0 = arith.constant 0 : i32
    return %arg0, %c0_i32 : i32, i32
  }
  func.func @transform_1(%arg0: i32) -> (i32, i32) {
    %c0_i32 = arith.constant 0 : i32
    %c0_i32_0 = arith.constant 0 : i32
    %c0_i32_1 = arith.constant 0 : i32
    return %c0_i32, %c0_i32_0 : i32, i32
  }
  func.func @transform_2(%arg0: i32) -> (i32, i32) {
    %c0_i32 = arith.constant 0 : i32
    %c0_i32_0 = arith.constant 0 : i32
    %c0_i32_1 = arith.constant 0 : i32
    return %c0_i32, %c0_i32_0 : i32, i32
  }
  func.func @transform_3(%arg0: i32) -> (i32, i32) {
    %c0_i32 = arith.constant 0 : i32
    %c0_i32_0 = arith.constant 0 : i32
    %c0_i32_1 = arith.constant 0 : i32
    return %c0_i32, %c0_i32_0 : i32, i32
  }
  func.func @transform_4(%arg0: i32) -> (i32, i32) {
    %c0_i32 = arith.constant 0 : i32
    %c0_i32_0 = arith.constant 0 : i32
    %c0_i32_1 = arith.constant 0 : i32
    return %c0_i32, %c0_i32_0 : i32, i32
  }
  func.func @transform_5(%arg0: i32) -> (i32, i32) {
    %c0_i32 = arith.constant 0 : i32
    %c0_i32_0 = arith.constant 0 : i32
    return %arg0, %c0_i32 : i32, i32
  }
}

module attributes {stable_mosaic.version = 11 : i64} {
  func.func @dblock_kernel(%arg0: i32, %arg1: memref<8x32xf32, #tpu.memory_space<vmem>>, %arg2: memref<32x256xf32, #tpu.memory_space<vmem>>, %arg3: memref<1x256xf32, #tpu.memory_space<vmem>>, %arg4: memref<128x128xf32, #tpu.memory_space<vmem>>, %arg5: memref<1x128xf32, #tpu.memory_space<vmem>>, %arg6: memref<8x128xf32, #tpu.memory_space<vmem>>) attributes {dimension_semantics = [#tpu.dimension_semantics<parallel>], iteration_bounds = array<i64: 1>, scalar_prefetch = 0 : i64, scratch_operands = 0 : i64, tpu.core_type = #tpu.core_type<tc>, window_params = [{transform_indices = @transform_0, window_bounds = array<i64: 8, 32>}, {pipeline_mode = #tpu.pipeline_mode<synchronous>, transform_indices = @transform_1, window_bounds = array<i64: 32, 256>}, {pipeline_mode = #tpu.pipeline_mode<synchronous>, transform_indices = @transform_2, window_bounds = array<i64: 1, 256>}, {pipeline_mode = #tpu.pipeline_mode<synchronous>, transform_indices = @transform_3, window_bounds = array<i64: 128, 128>}, {pipeline_mode = #tpu.pipeline_mode<synchronous>, transform_indices = @transform_4, window_bounds = array<i64: 1, 128>}, {transform_indices = @transform_5, window_bounds = array<i64: 8, 128>}]} {
    %c0 = arith.constant 0 : index
    %c0_0 = arith.constant 0 : index
    %0 = vector.load %arg1[%c0, %c0_0] : memref<8x32xf32, #tpu.memory_space<vmem>>, vector<8x32xf32>
    %c0_1 = arith.constant 0 : index
    %c0_2 = arith.constant 0 : index
    %1 = vector.load %arg2[%c0_1, %c0_2] : memref<32x256xf32, #tpu.memory_space<vmem>>, vector<32x256xf32>
    %cst = arith.constant dense<0.000000e+00> : vector<8x256xf32>
    %2 = tpu.matmul %0, %1, %cst {dimension_numbers = #tpu.dot_dimension_numbers<[1], [0], [0], [1], [0, 0, 1, 1], [], []>} : vector<8x32xf32>, vector<32x256xf32>, vector<8x256xf32> -> vector<8x256xf32>
    %c0_3 = arith.constant 0 : index
    %c0_4 = arith.constant 0 : index
    %3 = vector.load %arg3[%c0_3, %c0_4] : memref<1x256xf32, #tpu.memory_space<vmem>>, vector<1x256xf32>
    %4 = vector.broadcast %3 : vector<1x256xf32> to vector<8x256xf32>
    %5 = arith.addf %2, %4 : vector<8x256xf32>
    %6 = vector.extract_strided_slice %5 {offsets = [0, 0], sizes = [8, 128], strides = [1, 1]} : vector<8x256xf32> to vector<8x128xf32>
    %7 = math.tanh %6 : vector<8x128xf32>
    %8 = vector.extract_strided_slice %5 {offsets = [0, 128], sizes = [8, 128], strides = [1, 1]} : vector<8x256xf32> to vector<8x128xf32>
    %9 = arith.negf %8 : vector<8x128xf32>
    %10 = math.exp %9 : vector<8x128xf32>
    %cst_5 = arith.constant 1.000000e+00 : f32
    %11 = vector.broadcast %cst_5 : f32 to vector<8x128xf32>
    %12 = arith.addf %11, %10 : vector<8x128xf32>
    %13 = arith.divf %11, %12 : vector<8x128xf32>
    %14 = arith.mulf %7, %13 : vector<8x128xf32>
    %c0_6 = arith.constant 0 : index
    %c0_7 = arith.constant 0 : index
    %15 = vector.load %arg4[%c0_6, %c0_7] : memref<128x128xf32, #tpu.memory_space<vmem>>, vector<128x128xf32>
    %cst_8 = arith.constant dense<0.000000e+00> : vector<8x128xf32>
    %16 = tpu.matmul %14, %15, %cst_8 {dimension_numbers = #tpu.dot_dimension_numbers<[1], [0], [0], [1], [0, 0, 1, 1], [], []>} : vector<8x128xf32>, vector<128x128xf32>, vector<8x128xf32> -> vector<8x128xf32>
    %c0_9 = arith.constant 0 : index
    %c0_10 = arith.constant 0 : index
    %17 = vector.load %arg5[%c0_9, %c0_10] : memref<1x128xf32, #tpu.memory_space<vmem>>, vector<1x128xf32>
    %18 = vector.broadcast %17 : vector<1x128xf32> to vector<8x128xf32>
    %19 = arith.addf %16, %18 : vector<8x128xf32>
    %c0_11 = arith.constant 0 : index
    %c0_12 = arith.constant 0 : index
    %20 = vector.load %arg6[%c0_11, %c0_12] : memref<8x128xf32, #tpu.memory_space<vmem>>, vector<8x128xf32>
    tpu.vector_store %arg6[%c0_11, %c0_12], %19 {strides = array<i32>} : memref<8x128xf32, #tpu.memory_space<vmem>>, vector<8x128xf32>,
    return
  }
  func.func @transform_0(%arg0: i32) -> (i32, i32) {
    %c0_i32 = arith.constant 0 : i32
    %c0_i32_0 = arith.constant 0 : i32
    return %arg0, %c0_i32 : i32, i32
  }
  func.func @transform_1(%arg0: i32) -> (i32, i32) {
    %c0_i32 = arith.constant 0 : i32
    %c0_i32_0 = arith.constant 0 : i32
    %c0_i32_1 = arith.constant 0 : i32
    return %c0_i32, %c0_i32_0 : i32, i32
  }
  func.func @transform_2(%arg0: i32) -> (i32, i32) {
    %c0_i32 = arith.constant 0 : i32
    %c0_i32_0 = arith.constant 0 : i32
    %c0_i32_1 = arith.constant 0 : i32
    return %c0_i32, %c0_i32_0 : i32, i32
  }
  func.func @transform_3(%arg0: i32) -> (i32, i32) {
    %c0_i32 = arith.constant 0 : i32
    %c0_i32_0 = arith.constant 0 : i32
    %c0_i32_1 = arith.constant 0 : i32
    return %c0_i32, %c0_i32_0 : i32, i32
  }
  func.func @transform_4(%arg0: i32) -> (i32, i32) {
    %c0_i32 = arith.constant 0 : i32
    %c0_i32_0 = arith.constant 0 : i32
    %c0_i32_1 = arith.constant 0 : i32
    return %c0_i32, %c0_i32_0 : i32, i32
  }
  func.func @transform_5(%arg0: i32) -> (i32, i32) {
    %c0_i32 = arith.constant 0 : i32
    %c0_i32_0 = arith.constant 0 : i32
    return %arg0, %c0_i32 : i32, i32
  }
}

</mosaic_0001>

<llo_original>
// kernel: tpu_custom_call.1
$region0: #{tpu_custom_call.1}
  #allocation0 [shape = 'u32[]', space=smem, size = 0x4, offset = 0x4, fixed_abs, tag = 'smem constant byte address 0x4 - core index']
  #allocation1 [shape = 'u32[72,128]{1,0:T(1,128)}', space=vmem, size = 0x9000, scoped, tag = 'internal scratch']
  %s0 = inlined_call_operand.hbm [shape: f32[8,32], index: 0, kind: input, shape index: {}]
  %s1 = inlined_call_operand.hbm [shape: f32[32,256], index: 1, kind: input, shape index: {}]
  %s2 = inlined_call_operand.hbm [shape: f32[1,256], index: 2, kind: input, shape index: {}]
  %s3 = inlined_call_operand.hbm [shape: f32[128,128], index: 3, kind: input, shape index: {}]
  %s4 = inlined_call_operand.vmem [shape: f32[1,128], index: 4, kind: input, shape index: {}]
  %s5 = inlined_call_operand.hbm [shape: f32[8,128], index: 5, kind: output, shape index: {}]
  %s6 = sld [smem:[#allocation0]]
  $region46: #{tpu_custom_call.1} parent=0
    _
  %s8 = ssub.s32 1, %s6
  %s9 = scalar_select 0, %s8, %s6
  $region1: #{tpu_custom_call.1} parent=0
    #allocation2 [shape = 'u8[4096]{0}', space=vmem, size = 0x1000, scoped, tag = 'input window, operand 0, single buffered']
    #allocation3 [shape = 's32[1]{0}', space=sflag, size = 0x4, scoped, tag = 'scoped memory for tpu_custom_call.1']
    #allocation4 [shape = 's32[1]{0}', space=sflag, size = 0x4, scoped, tag = 'scoped memory for tpu_custom_call.1']
    #allocation5 [shape = 'u8[32768]{0}', space=vmem, size = 0x8000, scoped, tag = 'input window, operand 1, single buffered']
    #allocation6 [shape = 's32[1]{0}', space=sflag, size = 0x4, scoped, tag = 'scoped memory for tpu_custom_call.1']
    #allocation7 [shape = 'u8[1024]{0}', space=vmem, size = 0x400, scoped, tag = 'input window, operand 2, single buffered']
    #allocation8 [shape = 'u8[65536]{0}', space=vmem, size = 0x10000, scoped, tag = 'input window, operand 3, single buffered']
    #allocation9 [shape = 's32[1]{0}', space=sflag, size = 0x4, scoped, tag = 'scoped memory for tpu_custom_call.1']
    #allocation10 [shape = 'u8[4096]{0}', space=vmem, size = 0x1000, scoped, tag = 'output window, operand 0, single buffered']
    %10 = vsyncpa [#allocation3], 0
    %11 = vsyncpa [#allocation6], 0
    %12 = vsyncpa [#allocation9], 0
    %13 = vsyncpa [#allocation4], 0
    // Predicated region
    $region2: #{tpu_custom_call.1} parent=1 // pred_check
      _
    $region3: #{tpu_custom_call.1} parent=1 // pred_check_branch
      %15 = sbr.rel (0) target = $region5
    $region4: #{tpu_custom_call.1} parent=1 // pred_region
      %17 = vsyncadd [#allocation3], 0
      %s19 = sshll.u32 %s0, 4
      %s20 = int_to_ptr.hbm [resolvable:$true] %s19
      %s21 = sshll.u32 [#allocation2], 4
      %s22 = int_to_ptr.vmem [resolvable:$true] %s21
      %24 = dma.hbm_to_vmem [thread:$0]  %s20, 128, %s22, [#allocation3]
    $region5: #{tpu_custom_call.1} parent=1 // pred_fallthru
      _
    // Predicated region
    $region6: #{tpu_custom_call.1} parent=1 // pred_check
      _
    $region7: #{tpu_custom_call.1} parent=1 // pred_check_branch
      %26 = sbr.rel (0) target = $region9
    $region8: #{tpu_custom_call.1} parent=1 // pred_region
      %28 = vsyncadd [#allocation6], 0
      %s29 = sshll.u32 %s1, 4
      %s30 = int_to_ptr.hbm [resolvable:$true] %s29
      %s31 = sshll.u32 [#allocation5], 4
      %s32 = int_to_ptr.vmem [resolvable:$true] %s31
      %37 = dma.hbm_to_vmem [thread:$0]  %s30, 1024, %s32, [#allocation6], 256, 256, 16
    $region9: #{tpu_custom_call.1} parent=1 // pred_fallthru
      _
    // Predicated region
    $region10: #{tpu_custom_call.1} parent=1 // pred_check
      _
    $region11: #{tpu_custom_call.1} parent=1 // pred_check_branch
      %39 = sbr.rel (0) target = $region13
    $region12: #{tpu_custom_call.1} parent=1 // pred_region
      %41 = vsyncadd [#allocation6], 0
      %s43 = sshll.u32 %s2, 4
      %s44 = int_to_ptr.hbm [resolvable:$true] %s43
      %s45 = sshll.u32 [#allocation7], 4
      %s46 = int_to_ptr.vmem [resolvable:$true] %s45
      %48 = dma.hbm_to_vmem [thread:$0]  %s44, 32, %s46, [#allocation6]
    $region13: #{tpu_custom_call.1} parent=1 // pred_fallthru
      _
    // Predicated region
    $region14: #{tpu_custom_call.1} parent=1 // pred_check
      _
    $region15: #{tpu_custom_call.1} parent=1 // pred_check_branch
      %50 = sbr.rel (0) target = $region17
    $region16: #{tpu_custom_call.1} parent=1 // pred_region
      %52 = vsyncadd [#allocation9], 0
      %s53 = sshll.u32 %s3, 4
      %s54 = int_to_ptr.hbm [resolvable:$true] %s53
      %s55 = sshll.u32 [#allocation8], 4
      %s56 = int_to_ptr.vmem [resolvable:$true] %s55
      %61 = dma.hbm_to_vmem [thread:$0]  %s54, 2048, %s56, [#allocation9], 128, 128, 8
    $region17: #{tpu_custom_call.1} parent=1 // pred_fallthru
      _
    // Predicated region
    $region18: #{tpu_custom_call.1} parent=1 // pred_check
      _
    $region19: #{tpu_custom_call.1} parent=1 // pred_check_branch
      %63 = sbr.rel (0) target = $region21
    $region20: #{tpu_custom_call.1} parent=1 // pred_region
      _
    $region21: #{tpu_custom_call.1} parent=1 // pred_fallthru
      _
    // Predicated region
    $region22: #{tpu_custom_call.1} parent=1 // pred_check
      _
    $region23: #{tpu_custom_call.1} parent=1 // pred_check_branch
      %65 = sbr.rel (0) target = $region25
    $region24: #{tpu_custom_call.1} parent=1 // pred_region
      %67 = dma.done [#allocation3], 128
    $region25: #{tpu_custom_call.1} parent=1 // pred_fallthru
      _
    // Predicated region
    $region26: #{tpu_custom_call.1} parent=1 // pred_check
      _
    $region27: #{tpu_custom_call.1} parent=1 // pred_check_branch
      %69 = sbr.rel (0) target = $region29
    $region28: #{tpu_custom_call.1} parent=1 // pred_region
      %71 = dma.done [#allocation6], 1024
    $region29: #{tpu_custom_call.1} parent=1 // pred_fallthru
      _
    // Predicated region
    $region30: #{tpu_custom_call.1} parent=1 // pred_check
      _
    $region31: #{tpu_custom_call.1} parent=1 // pred_check_branch
      %73 = sbr.rel (0) target = $region33
    $region32: #{tpu_custom_call.1} parent=1 // pred_region
      %75 = dma.done [#allocation6], 32
    $region33: #{tpu_custom_call.1} parent=1 // pred_fallthru
      _
    // Predicated region
    $region34: #{tpu_custom_call.1} parent=1 // pred_check
      _
    $region35: #{tpu_custom_call.1} parent=1 // pred_check_branch
      %77 = sbr.rel (0) target = $region37
    $region36: #{tpu_custom_call.1} parent=1 // pred_region
      %79 = dma.done [#allocation9], 2048
    $region37: #{tpu_custom_call.1} parent=1 // pred_fallthru
      _
    %v80 = vld [vmem:[#allocation2] sm:$0xff]
    %v81 = vld [vmem:[#allocation5] sm:$0xff]
    %v82 = vld [vmem:[#allocation5 + $0x8] sm:$0xff]
    %v83 = vld [vmem:[#allocation5 + $0x10] sm:$0xff]
    %v84 = vld [vmem:[#allocation5 + $0x18] sm:$0xff]
    %v85 = vld [vmem:[#allocation5 + $0x20] sm:$0xff]
    %v86 = vld [vmem:[#allocation5 + $0x28] sm:$0xff]
    %v87 = vld [vmem:[#allocation5 + $0x30] sm:$0xff]
    %v88 = vld [vmem:[#allocation5 + $0x38] sm:$0xff]
    %v89 = vld [vmem:[#allocation7] sm:$0x3]
    %v91 = vperm.slane %v89, 0
    %v92 = vperm.slane %v89, 1
    %vm95 = vcmask 261120
    %v97 = vsel %vm95, %v80, 0
    %99 = vmatpush.msra.mxu0 0.0
    %100 = vmatpush.msra.mxu0 0.0
    %101 = vmatpush.msra.mxu0 0.0
    %102 = vmatpush.msra.mxu0 0.0
    %103 = vmatpush.msra.mxu0 0.0
    %104 = vmatpush.msra.mxu0 0.0
    %105 = vmatpush.msra.mxu0 0.0
    %106 = vmatpush.msra.mxu0 0.0
    %107 = vmatpush.msra.mxu0 0.0
    %108 = vmatpush.msra.mxu0 0.0
    %109 = vmatpush.msra.mxu0 0.0
    %110 = vmatpush.msra.mxu0 0.0
    %111 = vmatpush.msra.mxu0 %v87
    %112 = vmatpush.msra.mxu0 %v85
    %113 = vmatpush.msra.mxu0 %v83
    %114 = vmatpush.msra.mxu0 %v81
    %115 = vmatmul.f32.gmra.mxu0 %v97
    %v116 = vpop.f32.mrf.mxu0
    %v117 = vadd.f32 %v91, %v116
    %118 = vdwg.mxu0
    %119 = vmatpush.msra.mxu0 0.0
    %120 = vmatpush.msra.mxu0 0.0
    %121 = vmatpush.msra.mxu0 0.0
    %122 = vmatpush.msra.mxu0 0.0
    %123 = vmatpush.msra.mxu0 0.0
    %124 = vmatpush.msra.mxu0 0.0
    %125 = vmatpush.msra.mxu0 0.0
    %126 = vmatpush.msra.mxu0 0.0
    %127 = vmatpush.msra.mxu0 0.0
    %128 = vmatpush.msra.mxu0 0.0
    %129 = vmatpush.msra.mxu0 0.0
    %130 = vmatpush.msra.mxu0 0.0
    %131 = vmatpush.msra.mxu0 %v88
    %132 = vmatpush.msra.mxu0 %v86
    %133 = vmatpush.msra.mxu0 %v84
    %134 = vmatpush.msra.mxu0 %v82
    %135 = vmatmul.f32.gmra.mxu0 %v97
    %v136 = vpop.f32.mrf.mxu0
    %v137 = vadd.f32 %v92, %v136
    %138 = vdwg.mxu0
    %v139 = vtanh.pop %v117
    %v140 = vxor.u32 %v137, 2147483648
    %v141 = vmul.f32 %v140, 1.442695
    %v142 = vpow.pop %v141
    %v143 = vadd.f32 %v142, 1.0
    %v144 = vrcp.pop %v143
    %v145 = vmul.f32 %v143, %v144
    %v146 = vsub.f32 1.0, %v145
    %v147 = vmul.f32 %v144, %v146
    %v148 = vadd.f32 %v144, %v147
    %vm149 = vweird.f32 %v143
    %vm150 = vweird.f32 %v144
    %vm151 = vmor %vm149, %vm150
    %v152 = vsel %vm151, %v144, %v148
    %v153 = vand.u32 2147483647, %v143
    %vm154 = vcmp.eq.f32.partialorder %v153, 8.507059e+37
    %v155 = vand.u32 %v143, 2147483648
    %v156 = vor.u32 1.1754944e-38, %v155
    %v157 = vsel %vm154, %v156, %v152
    %v158 = vmul.f32 1.0, %v157
    %v159 = vmul.f32 %v139, %v158
    %v160 = vld [vmem:[#allocation8] sm:$0xff]
    %v161 = vld [vmem:[#allocation8 + $0x8] sm:$0xff]
    %v162 = vld [vmem:[#allocation8 + $0x10] sm:$0xff]
    %v163 = vld [vmem:[#allocation8 + $0x18] sm:$0xff]
    %v164 = vld [vmem:[#allocation8 + $0x20] sm:$0xff]
    %v165 = vld [vmem:[#allocation8 + $0x28] sm:$0xff]
    %v166 = vld [vmem:[#allocation8 + $0x30] sm:$0xff]
    %v167 = vld [vmem:[#allocation8 + $0x38] sm:$0xff]
    %v168 = vld [vmem:[#allocation8 + $0x40] sm:$0xff]
    %v169 = vld [vmem:[#allocation8 + $0x48] sm:$0xff]
    %v170 = vld [vmem:[#allocation8 + $0x50] sm:$0xff]
    %v171 = vld [vmem:[#allocation8 + $0x58] sm:$0xff]
    %v172 = vld [vmem:[#allocation8 + $0x60] sm:$0xff]
    %v173 = vld [vmem:[#allocation8 + $0x68] sm:$0xff]
    %v174 = vld [vmem:[#allocation8 + $0x70] sm:$0xff]
    %v175 = vld [vmem:[#allocation8 + $0x78] sm:$0xff]
    %v176 = vld [vmem:[%s4] sm:$0x1]
    %v178 = vperm.slane %v176, 0
    %180 = vmatpush.msra.mxu0 %v175
    %181 = vmatpush.msra.mxu0 %v174
    %182 = vmatpush.msra.mxu0 %v173
    %183 = vmatpush.msra.mxu0 %v172
    %184 = vmatpush.msra.mxu0 %v171
    %185 = vmatpush.msra.mxu0 %v170
    %186 = vmatpush.msra.mxu0 %v169
    %187 = vmatpush.msra.mxu0 %v168
    %188 = vmatpush.msra.mxu0 %v167
    %189 = vmatpush.msra.mxu0 %v166
    %190 = vmatpush.msra.mxu0 %v165
    %191 = vmatpush.msra.mxu0 %v164
    %192 = vmatpush.msra.mxu0 %v163
    %193 = vmatpush.msra.mxu0 %v162
    %194 = vmatpush.msra.mxu0 %v161
    %195 = vmatpush.msra.mxu0 %v160
    %196 = vmatmul.f32.gmra.mxu0 %v159
    %v197 = vpop.f32.mrf.mxu0
    %v198 = vadd.f32 %v178, %v197
    %199 = vdwg.mxu0
    %200 = vst [vmem:[#allocation10] sm:$0xff] %v198
    // Predicated region
    $region38: #{tpu_custom_call.1} parent=1 // pred_check
      _
    $region39: #{tpu_custom_call.1} parent=1 // pred_check_branch
      %202 = sbr.rel (0) target = $region41
    $region40: #{tpu_custom_call.1} parent=1 // pred_region
      %204 = vsyncadd [#allocation4], 0
      %s206 = sshll.u32 [#allocation10], 4
      %s207 = int_to_ptr.vmem [resolvable:$true] %s206
      %s208 = sshll.u32 %s5, 4
      %s209 = int_to_ptr.hbm [resolvable:$true] %s208
      %211 = dma.vmem_to_hbm [thread:$0]  %s207, 128, %s209, [#allocation4]
    $region41: #{tpu_custom_call.1} parent=1 // pred_fallthru
      _
    // Predicated region
    $region42: #{tpu_custom_call.1} parent=1 // pred_check
      _
    $region43: #{tpu_custom_call.1} parent=1 // pred_check_branch
      %213 = sbr.rel (0) target = $region45
    $region44: #{tpu_custom_call.1} parent=1 // pred_region
      %215 = dma.done [#allocation4], 128
    $region45: #{tpu_custom_call.1} parent=1 // pred_fallthru
      _
    %216 = vsyncpa [#allocation3], 1
    %217 = vsyncpa [#allocation6], 1
    %218 = vsyncpa [#allocation9], 1
    %219 = vsyncpa [#allocation4], 1

// kernel: tpu_custom_call.1
$region0: #{tpu_custom_call.1}
  #allocation0 [shape = 'u32[]', space=smem, size = 0x4, offset = 0x4, fixed_abs, tag = 'smem constant byte address 0x4 - core index']
  #allocation1 [shape = 'u32[72,128]{1,0:T(1,128)}', space=vmem, size = 0x9000, scoped, tag = 'internal scratch']
  %s0 = inlined_call_operand.hbm [shape: f32[8,32], index: 0, kind: input, shape index: {}]
  %s1 = inlined_call_operand.hbm [shape: f32[32,256], index: 1, kind: input, shape index: {}]
  %s2 = inlined_call_operand.hbm [shape: f32[1,256], index: 2, kind: input, shape index: {}]
  %s3 = inlined_call_operand.hbm [shape: f32[128,128], index: 3, kind: input, shape index: {}]
  %s4 = inlined_call_operand.vmem [shape: f32[1,128], index: 4, kind: input, shape index: {}]
  %s5 = inlined_call_operand.hbm [shape: f32[8,128], index: 5, kind: output, shape index: {}]
  %s6 = sld [smem:[#allocation0]]
  $region46: #{tpu_custom_call.1} parent=0
    _
  %s8 = ssub.s32 1, %s6
  %s9 = scalar_select 0, %s8, %s6
  $region1: #{tpu_custom_call.1} parent=0
    #allocation2 [shape = 'u8[4096]{0}', space=vmem, size = 0x1000, scoped, tag = 'input window, operand 0, single buffered']
    #allocation3 [shape = 's32[1]{0}', space=sflag, size = 0x4, scoped, tag = 'scoped memory for tpu_custom_call.1']
    #allocation4 [shape = 's32[1]{0}', space=sflag, size = 0x4, scoped, tag = 'scoped memory for tpu_custom_call.1']
    #allocation5 [shape = 'u8[32768]{0}', space=vmem, size = 0x8000, scoped, tag = 'input window, operand 1, single buffered']
    #allocation6 [shape = 's32[1]{0}', space=sflag, size = 0x4, scoped, tag = 'scoped memory for tpu_custom_call.1']
    #allocation7 [shape = 'u8[1024]{0}', space=vmem, size = 0x400, scoped, tag = 'input window, operand 2, single buffered']
    #allocation8 [shape = 'u8[65536]{0}', space=vmem, size = 0x10000, scoped, tag = 'input window, operand 3, single buffered']
    #allocation9 [shape = 's32[1]{0}', space=sflag, size = 0x4, scoped, tag = 'scoped memory for tpu_custom_call.1']
    #allocation10 [shape = 'u8[4096]{0}', space=vmem, size = 0x1000, scoped, tag = 'output window, operand 0, single buffered']
    %10 = vsyncpa [#allocation3], 0
    %11 = vsyncpa [#allocation6], 0
    %12 = vsyncpa [#allocation9], 0
    %13 = vsyncpa [#allocation4], 0
    // Predicated region
    $region2: #{tpu_custom_call.1} parent=1 // pred_check
      _
    $region3: #{tpu_custom_call.1} parent=1 // pred_check_branch
      %15 = sbr.rel (0) target = $region5
    $region4: #{tpu_custom_call.1} parent=1 // pred_region
      %17 = vsyncadd [#allocation3], 0
      %s19 = sshll.u32 %s0, 4
      %s20 = int_to_ptr.hbm [resolvable:$true] %s19
      %s21 = sshll.u32 [#allocation2], 4
      %s22 = int_to_ptr.vmem [resolvable:$true] %s21
      %24 = dma.hbm_to_vmem [thread:$0]  %s20, 128, %s22, [#allocation3]
    $region5: #{tpu_custom_call.1} parent=1 // pred_fallthru
      _
    // Predicated region
    $region6: #{tpu_custom_call.1} parent=1 // pred_check
      _
    $region7: #{tpu_custom_call.1} parent=1 // pred_check_branch
      %26 = sbr.rel (0) target = $region9
    $region8: #{tpu_custom_call.1} parent=1 // pred_region
      %28 = vsyncadd [#allocation6], 0
      %s29 = sshll.u32 %s1, 4
      %s30 = int_to_ptr.hbm [resolvable:$true] %s29
      %s31 = sshll.u32 [#allocation5], 4
      %s32 = int_to_ptr.vmem [resolvable:$true] %s31
      %37 = dma.hbm_to_vmem [thread:$0]  %s30, 1024, %s32, [#allocation6], 256, 256, 16
    $region9: #{tpu_custom_call.1} parent=1 // pred_fallthru
      _
    // Predicated region
    $region10: #{tpu_custom_call.1} parent=1 // pred_check
      _
    $region11: #{tpu_custom_call.1} parent=1 // pred_check_branch
      %39 = sbr.rel (0) target = $region13
    $region12: #{tpu_custom_call.1} parent=1 // pred_region
      %41 = vsyncadd [#allocation6], 0
      %s43 = sshll.u32 %s2, 4
      %s44 = int_to_ptr.hbm [resolvable:$true] %s43
      %s45 = sshll.u32 [#allocation7], 4
      %s46 = int_to_ptr.vmem [resolvable:$true] %s45
      %48 = dma.hbm_to_vmem [thread:$0]  %s44, 32, %s46, [#allocation6]
    $region13: #{tpu_custom_call.1} parent=1 // pred_fallthru
      _
    // Predicated region
    $region14: #{tpu_custom_call.1} parent=1 // pred_check
      _
    $region15: #{tpu_custom_call.1} parent=1 // pred_check_branch
      %50 = sbr.rel (0) target = $region17
    $region16: #{tpu_custom_call.1} parent=1 // pred_region
      %52 = vsyncadd [#allocation9], 0
      %s53 = sshll.u32 %s3, 4
      %s54 = int_to_ptr.hbm [resolvable:$true] %s53
      %s55 = sshll.u32 [#allocation8], 4
      %s56 = int_to_ptr.vmem [resolvable:$true] %s55
      %61 = dma.hbm_to_vmem [thread:$0]  %s54, 2048, %s56, [#allocation9], 128, 128, 8
    $region17: #{tpu_custom_call.1} parent=1 // pred_fallthru
      _
    // Predicated region
    $region18: #{tpu_custom_call.1} parent=1 // pred_check
      _
    $region19: #{tpu_custom_call.1} parent=1 // pred_check_branch
      %63 = sbr.rel (0) target = $region21
    $region20: #{tpu_custom_call.1} parent=1 // pred_region
      _
    $region21: #{tpu_custom_call.1} parent=1 // pred_fallthru
      _
    // Predicated region
    $region22: #{tpu_custom_call.1} parent=1 // pred_check
      _
    $region23: #{tpu_custom_call.1} parent=1 // pred_check_branch
      %65 = sbr.rel (0) target = $region25
    $region24: #{tpu_custom_call.1} parent=1 // pred_region
      %67 = dma.done [#allocation3], 128
    $region25: #{tpu_custom_call.1} parent=1 // pred_fallthru
      _
    // Predicated region
    $region26: #{tpu_custom_call.1} parent=1 // pred_check
      _
    $region27: #{tpu_custom_call.1} parent=1 // pred_check_branch
      %69 = sbr.rel (0) target = $region29
    $region28: #{tpu_custom_call.1} parent=1 // pred_region
      %71 = dma.done [#allocation6], 1024
    $region29: #{tpu_custom_call.1} parent=1 // pred_fallthru
      _
    // Predicated region
    $region30: #{tpu_custom_call.1} parent=1 // pred_check
      _
    $region31: #{tpu_custom_call.1} parent=1 // pred_check_branch
      %73 = sbr.rel (0) target = $region33
    $region32: #{tpu_custom_call.1} parent=1 // pred_region
      %75 = dma.done [#allocation6], 32
    $region33: #{tpu_custom_call.1} parent=1 // pred_fallthru
      _
    // Predicated region
    $region34: #{tpu_custom_call.1} parent=1 // pred_check
      _
    $region35: #{tpu_custom_call.1} parent=1 // pred_check_branch
      %77 = sbr.rel (0) target = $region37
    $region36: #{tpu_custom_call.1} parent=1 // pred_region
      %79 = dma.done [#allocation9], 2048
    $region37: #{tpu_custom_call.1} parent=1 // pred_fallthru
      _
    %v80 = vld [vmem:[#allocation2] sm:$0xff]
    %v81 = vld [vmem:[#allocation5] sm:$0xff]
    %v82 = vld [vmem:[#allocation5 + $0x8] sm:$0xff]
    %v83 = vld [vmem:[#allocation5 + $0x10] sm:$0xff]
    %v84 = vld [vmem:[#allocation5 + $0x18] sm:$0xff]
    %v85 = vld [vmem:[#allocation5 + $0x20] sm:$0xff]
    %v86 = vld [vmem:[#allocation5 + $0x28] sm:$0xff]
    %v87 = vld [vmem:[#allocation5 + $0x30] sm:$0xff]
    %v88 = vld [vmem:[#allocation5 + $0x38] sm:$0xff]
    %v89 = vld [vmem:[#allocation7] sm:$0x3]
    %v91 = vperm.slane %v89, 0
    %v92 = vperm.slane %v89, 1
    %vm95 = vcmask 261120
    %v97 = vsel %vm95, %v80, 0
    %99 = vmatpush.msra.mxu0 0.0
    %100 = vmatpush.msra.mxu0 0.0
    %101 = vmatpush.msra.mxu0 0.0
    %102 = vmatpush.msra.mxu0 0.0
    %103 = vmatpush.msra.mxu0 0.0
    %104 = vmatpush.msra.mxu0 0.0
    %105 = vmatpush.msra.mxu0 0.0
    %106 = vmatpush.msra.mxu0 0.0
    %107 = vmatpush.msra.mxu0 0.0
    %108 = vmatpush.msra.mxu0 0.0
    %109 = vmatpush.msra.mxu0 0.0
    %110 = vmatpush.msra.mxu0 0.0
    %111 = vmatpush.msra.mxu0 %v87
    %112 = vmatpush.msra.mxu0 %v85
    %113 = vmatpush.msra.mxu0 %v83
    %114 = vmatpush.msra.mxu0 %v81
    %115 = vmatmul.f32.gmra.mxu0 %v97
    %v116 = vpop.f32.mrf.mxu0
    %v117 = vadd.f32 %v91, %v116
    %118 = vdwg.mxu0
    %119 = vmatpush.msra.mxu0 0.0
    %120 = vmatpush.msra.mxu0 0.0
    %121 = vmatpush.msra.mxu0 0.0
    %122 = vmatpush.msra.mxu0 0.0
    %123 = vmatpush.msra.mxu0 0.0
    %124 = vmatpush.msra.mxu0 0.0
    %125 = vmatpush.msra.mxu0 0.0
    %126 = vmatpush.msra.mxu0 0.0
    %127 = vmatpush.msra.mxu0 0.0
    %128 = vmatpush.msra.mxu0 0.0
    %129 = vmatpush.msra.mxu0 0.0
    %130 = vmatpush.msra.mxu0 0.0
    %131 = vmatpush.msra.mxu0 %v88
    %132 = vmatpush.msra.mxu0 %v86
    %133 = vmatpush.msra.mxu0 %v84
    %134 = vmatpush.msra.mxu0 %v82
    %135 = vmatmul.f32.gmra.mxu0 %v97
    %v136 = vpop.f32.mrf.mxu0
    %v137 = vadd.f32 %v92, %v136
    %138 = vdwg.mxu0
    %v139 = vtanh.pop %v117
    %v140 = vxor.u32 %v137, 2147483648
    %v141 = vmul.f32 %v140, 1.442695
    %v142 = vpow.pop %v141
    %v143 = vadd.f32 %v142, 1.0
    %v144 = vrcp.pop %v143
    %v145 = vmul.f32 %v143, %v144
    %v146 = vsub.f32 1.0, %v145
    %v147 = vmul.f32 %v144, %v146
    %v148 = vadd.f32 %v144, %v147
    %vm149 = vweird.f32 %v143
    %vm150 = vweird.f32 %v144
    %vm151 = vmor %vm149, %vm150
    %v152 = vsel %vm151, %v144, %v148
    %v153 = vand.u32 2147483647, %v143
    %vm154 = vcmp.eq.f32.partialorder %v153, 8.507059e+37
    %v155 = vand.u32 %v143, 2147483648
    %v156 = vor.u32 1.1754944e-38, %v155
    %v157 = vsel %vm154, %v156, %v152
    %v158 = vmul.f32 1.0, %v157
    %v159 = vmul.f32 %v139, %v158
    %v160 = vld [vmem:[#allocation8] sm:$0xff]
    %v161 = vld [vmem:[#allocation8 + $0x8] sm:$0xff]
    %v162 = vld [vmem:[#allocation8 + $0x10] sm:$0xff]
    %v163 = vld [vmem:[#allocation8 + $0x18] sm:$0xff]
    %v164 = vld [vmem:[#allocation8 + $0x20] sm:$0xff]
    %v165 = vld [vmem:[#allocation8 + $0x28] sm:$0xff]
    %v166 = vld [vmem:[#allocation8 + $0x30] sm:$0xff]
    %v167 = vld [vmem:[#allocation8 + $0x38] sm:$0xff]
    %v168 = vld [vmem:[#allocation8 + $0x40] sm:$0xff]
    %v169 = vld [vmem:[#allocation8 + $0x48] sm:$0xff]
    %v170 = vld [vmem:[#allocation8 + $0x50] sm:$0xff]
    %v171 = vld [vmem:[#allocation8 + $0x58] sm:$0xff]
    %v172 = vld [vmem:[#allocation8 + $0x60] sm:$0xff]
    %v173 = vld [vmem:[#allocation8 + $0x68] sm:$0xff]
    %v174 = vld [vmem:[#allocation8 + $0x70] sm:$0xff]
    %v175 = vld [vmem:[#allocation8 + $0x78] sm:$0xff]
    %v176 = vld [vmem:[%s4] sm:$0x1]
    %v178 = vperm.slane %v176, 0
    %180 = vmatpush.msra.mxu0 %v175
    %181 = vmatpush.msra.mxu0 %v174
    %182 = vmatpush.msra.mxu0 %v173
    %183 = vmatpush.msra.mxu0 %v172
    %184 = vmatpush.msra.mxu0 %v171
    %185 = vmatpush.msra.mxu0 %v170
    %186 = vmatpush.msra.mxu0 %v169
    %187 = vmatpush.msra.mxu0 %v168
    %188 = vmatpush.msra.mxu0 %v167
    %189 = vmatpush.msra.mxu0 %v166
    %190 = vmatpush.msra.mxu0 %v165
    %191 = vmatpush.msra.mxu0 %v164
    %192 = vmatpush.msra.mxu0 %v163
    %193 = vmatpush.msra.mxu0 %v162
    %194 = vmatpush.msra.mxu0 %v161
    %195 = vmatpush.msra.mxu0 %v160
    %196 = vmatmul.f32.gmra.mxu0 %v159
    %v197 = vpop.f32.mrf.mxu0
    %v198 = vadd.f32 %v178, %v197
    %199 = vdwg.mxu0
    %200 = vst [vmem:[#allocation10] sm:$0xff] %v198
    // Predicated region
    $region38: #{tpu_custom_call.1} parent=1 // pred_check
      _
    $region39: #{tpu_custom_call.1} parent=1 // pred_check_branch
      %202 = sbr.rel (0) target = $region41
    $region40: #{tpu_custom_call.1} parent=1 // pred_region
      %204 = vsyncadd [#allocation4], 0
      %s206 = sshll.u32 [#allocation10], 4
      %s207 = int_to_ptr.vmem [resolvable:$true] %s206
      %s208 = sshll.u32 %s5, 4
      %s209 = int_to_ptr.hbm [resolvable:$true] %s208
      %211 = dma.vmem_to_hbm [thread:$0]  %s207, 128, %s209, [#allocation4]
    $region41: #{tpu_custom_call.1} parent=1 // pred_fallthru
      _
    // Predicated region
    $region42: #{tpu_custom_call.1} parent=1 // pred_check
      _
    $region43: #{tpu_custom_call.1} parent=1 // pred_check_branch
      %213 = sbr.rel (0) target = $region45
    $region44: #{tpu_custom_call.1} parent=1 // pred_region
      %215 = dma.done [#allocation4], 128
    $region45: #{tpu_custom_call.1} parent=1 // pred_fallthru
      _
    %216 = vsyncpa [#allocation3], 1
    %217 = vsyncpa [#allocation6], 1
    %218 = vsyncpa [#allocation9], 1
    %219 = vsyncpa [#allocation4], 1

</llo_original>
